<compile_context>
chip_gen: v5e
topology: v5e:2x2
jax: 0.10.0
libtpu: 0.0.40
codegen_flags: <defaults>
</compile_context>

<pallas_src>
import jax
import jax.numpy as jnp
from jax.experimental import pallas as pl
from jax.experimental.pallas import tpu as pltpu

SUBLANES = 8


def _round_up(x, m):
    return ((x + m - 1) // m) * m


def mlp_kernel(x_ref, w1_ref, b1_ref, w2_ref, b2_ref, o_ref):
    # First matmul on the MXU, f32 accumulation; bias + ReLU on the VPU in f32.
    h = jnp.dot(x_ref[...], w1_ref[...], preferred_element_type=jnp.float32)
    h = jnp.maximum(h + b1_ref[...], 0.0)
    # Second matmul + bias; output stays f32, no cast needed.
    y = jnp.dot(h, w2_ref[...], preferred_element_type=jnp.float32)
    o_ref[...] = y + b2_ref[...]


def simple_test_model_forward(x, w1, b1, w2, b2, *, tile_b=2048,
                              vmem_limit_bytes=None, jnp_fallback_below=0):
    """x: (B, input_dim) f32; w1: (in, hidden); w2: (hidden, out)  (PyTorch weight.T).
    b1: (hidden,), b2: (out,). Returns (B, output_dim) f32."""
    B, d_in = x.shape
    d_hidden = w1.shape[1]
    d_out = w2.shape[1]

    if B < jnp_fallback_below:
        # Tiny-batch path: pallas_call launch overhead dominates; plain XLA wins.
        return jnp.maximum(x @ w1 + b1, 0.0) @ w2 + b2

    # Pad batch only to a sublane multiple (8); never to tile_b.
    B_p = _round_up(B, SUBLANES)

    # Clamp the tile to the padded batch, keep it a multiple of 8.
    tile_b = _round_up(max(SUBLANES, min(tile_b, B_p)), SUBLANES)
    # v7x megacore: when the batch allows, guarantee >= 4 grid steps so the "parallel"
    # axis actually splits across both TensorCores and each core still double-buffers.
    four_step_tile = (B_p // 4) // SUBLANES * SUBLANES
    if four_step_tile >= SUBLANES:
        tile_b = min(tile_b, four_step_tile)

    grid = (pl.cdiv(B_p, tile_b),)

    # Batch-only zero padding of x (skipped entirely when already aligned).
    xp = x if B_p == B else jnp.pad(x, ((0, B_p - B), (0, 0)))
    b1r = b1.reshape(1, d_hidden)
    b2r = b2.reshape(1, d_out)

    cost = pl.CostEstimate(
        flops=2 * B_p * (d_in * d_hidden + d_hidden * d_out),
        transcendentals=0,
        bytes_accessed=4 * (B_p * (d_in + d_out)
                            + d_in * d_hidden + d_hidden
                            + d_hidden * d_out + d_out),
    )

    out_p = pl.pallas_call(
        mlp_kernel,
        out_shape=jax.ShapeDtypeStruct((B_p, d_out), jnp.float32),
        grid_spec=pl.GridSpec(
            grid=grid,
            in_specs=[
                # x: batch-tiled, last dim = full array dim (Mosaic lane-pads in VMEM).
                pl.BlockSpec((tile_b, d_in), lambda i: (i, 0)),
                # Weights / biases: full-array blocks, VMEM-resident across steps.
                pl.BlockSpec((d_in, d_hidden), lambda i: (0, 0)),
                pl.BlockSpec((1, d_hidden), lambda i: (0, 0)),
                pl.BlockSpec((d_hidden, d_out), lambda i: (0, 0)),
                pl.BlockSpec((1, d_out), lambda i: (0, 0)),
            ],
            out_specs=pl.BlockSpec((tile_b, d_out), lambda i: (i, 0)),
        ),
        compiler_params=pltpu.CompilerParams(
            dimension_semantics=("parallel",),   # independent batch rows -> megacore on v7x
            vmem_limit_bytes=vmem_limit_bytes,   # raise when sweeping tile_b upward
        ),
        cost_estimate=cost,
    )(xp, w1, b1r, w2, b2r)

    return out_p if B_p == B else out_p[:B]


def init_params(key, input_dim=10, hidden_dim=20, output_dim=2):
    """Deterministic init mimicking nn.Linear's uniform(-1/sqrt(fan_in), +1/sqrt(fan_in))."""
    k1, k2, k3, k4 = jax.random.split(key, 4)
    bound1 = 1.0 / jnp.sqrt(float(input_dim))
    bound2 = 1.0 / jnp.sqrt(float(hidden_dim))
    # Stored as (in_dim, out_dim) == PyTorch weight.T
    w1 = jax.random.uniform(k1, (input_dim, hidden_dim), jnp.float32, -bound1, bound1)
    b1 = jax.random.uniform(k2, (hidden_dim,), jnp.float32, -bound1, bound1)
    w2 = jax.random.uniform(k3, (hidden_dim, output_dim), jnp.float32, -bound2, bound2)
    b2 = jax.random.uniform(k4, (output_dim,), jnp.float32, -bound2, bound2)
    return w1, b1, w2, b2


if __name__ == "__main__":
    key = jax.random.PRNGKey(0)
    kx, kp = jax.random.split(key)

    B, input_dim, hidden_dim, output_dim = 8, 10, 20, 2
    x = jax.random.normal(kx, (B, input_dim), jnp.float32)
    w1, b1, w2, b2 = init_params(kp, input_dim, hidden_dim, output_dim)

    out = simple_test_model_forward(x, w1, b1, w2, b2)
    out = jax.block_until_ready(out)

    # Reference in plain JAX (same semantics as the PyTorch module).
    ref = jnp.maximum(x @ w1 + b1, 0.0) @ w2 + b2
    assert out.shape == (B, output_dim)
    assert jnp.allclose(out, ref, atol=1e-5, rtol=1e-5)

    print("KERNEL_OK")
</pallas_src>

<mosaic_0001>
module attributes {stable_mosaic.version = 11 : i64} {
  func.func @mlp_kernel(%arg0: i32, %arg1: memref<8x10xf32, #tpu.memory_space<vmem>>, %arg2: memref<10x20xf32, #tpu.memory_space<vmem>>, %arg3: memref<1x20xf32, #tpu.memory_space<vmem>>, %arg4: memref<20x2xf32, #tpu.memory_space<vmem>>, %arg5: memref<1x2xf32, #tpu.memory_space<vmem>>, %arg6: memref<8x2xf32, #tpu.memory_space<vmem>>) attributes {dimension_semantics = [#tpu.dimension_semantics<parallel>], iteration_bounds = array<i64: 1>, scalar_prefetch = 0 : i64, scratch_operands = 0 : i64, tpu.core_type = #tpu.core_type<tc>, window_params = [{transform_indices = @transform_0, window_bounds = array<i64: 8, 10>}, {pipeline_mode = #tpu.pipeline_mode<synchronous>, transform_indices = @transform_1, window_bounds = array<i64: 10, 20>}, {pipeline_mode = #tpu.pipeline_mode<synchronous>, transform_indices = @transform_2, window_bounds = array<i64: 1, 20>}, {pipeline_mode = #tpu.pipeline_mode<synchronous>, transform_indices = @transform_3, window_bounds = array<i64: 20, 2>}, {pipeline_mode = #tpu.pipeline_mode<synchronous>, transform_indices = @transform_4, window_bounds = array<i64: 1, 2>}, {transform_indices = @transform_5, window_bounds = array<i64: 8, 2>}]} {
    %c0 = arith.constant 0 : index
    %c0_0 = arith.constant 0 : index
    %0 = vector.load %arg1[%c0, %c0_0] : memref<8x10xf32, #tpu.memory_space<vmem>>, vector<8x10xf32>
    %c0_1 = arith.constant 0 : index
    %c0_2 = arith.constant 0 : index
    %1 = vector.load %arg2[%c0_1, %c0_2] : memref<10x20xf32, #tpu.memory_space<vmem>>, vector<10x20xf32>
    %cst = arith.constant dense<0.000000e+00> : vector<8x20xf32>
    %2 = tpu.matmul %0, %1, %cst {dimension_numbers = #tpu.dot_dimension_numbers<[1], [0], [0], [1], [0, 0, 1, 1], [], []>} : vector<8x10xf32>, vector<10x20xf32>, vector<8x20xf32> -> vector<8x20xf32>
    %c0_3 = arith.constant 0 : index
    %c0_4 = arith.constant 0 : index
    %3 = vector.load %arg3[%c0_3, %c0_4] : memref<1x20xf32, #tpu.memory_space<vmem>>, vector<1x20xf32>
    %4 = vector.broadcast %3 : vector<1x20xf32> to vector<8x20xf32>
    %5 = arith.addf %2, %4 : vector<8x20xf32>
    %cst_5 = arith.constant 0.000000e+00 : f32
    %6 = vector.broadcast %cst_5 : f32 to vector<8x20xf32>
    %7 = arith.maximumf %5, %6 : vector<8x20xf32>
    %c0_6 = arith.constant 0 : index
    %c0_7 = arith.constant 0 : index
    %8 = vector.load %arg4[%c0_6, %c0_7] : memref<20x2xf32, #tpu.memory_space<vmem>>, vector<20x2xf32>
    %cst_8 = arith.constant dense<0.000000e+00> : vector<8x2xf32>
    %9 = tpu.matmul %7, %8, %cst_8 {dimension_numbers = #tpu.dot_dimension_numbers<[1], [0], [0], [1], [0, 0, 1, 1], [], []>} : vector<8x20xf32>, vector<20x2xf32>, vector<8x2xf32> -> vector<8x2xf32>
    %c0_9 = arith.constant 0 : index
    %c0_10 = arith.constant 0 : index
    %10 = vector.load %arg5[%c0_9, %c0_10] : memref<1x2xf32, #tpu.memory_space<vmem>>, vector<1x2xf32>
    %11 = vector.broadcast %10 : vector<1x2xf32> to vector<8x2xf32>
    %12 = arith.addf %9, %11 : vector<8x2xf32>
    %c0_11 = arith.constant 0 : index
    %c0_12 = arith.constant 0 : index
    %13 = vector.load %arg6[%c0_11, %c0_12] : memref<8x2xf32, #tpu.memory_space<vmem>>, vector<8x2xf32>
    tpu.vector_store %arg6[%c0_11, %c0_12], %12 {strides = array<i32>} : memref<8x2xf32, #tpu.memory_space<vmem>>, vector<8x2xf32>,
    return
  }
  func.func @transform_0(%arg0: i32) -> (i32, i32) {
    %c0_i32 = arith.constant 0 : i32
    %c0_i32_0 = arith.constant 0 : i32
    return %arg0, %c0_i32 : i32, i32
  }
  func.func @transform_1(%arg0: i32) -> (i32, i32) {
    %c0_i32 = arith.constant 0 : i32
    %c0_i32_0 = arith.constant 0 : i32
    %c0_i32_1 = arith.constant 0 : i32
    return %c0_i32, %c0_i32_0 : i32, i32
  }
  func.func @transform_2(%arg0: i32) -> (i32, i32) {
    %c0_i32 = arith.constant 0 : i32
    %c0_i32_0 = arith.constant 0 : i32
    %c0_i32_1 = arith.constant 0 : i32
    return %c0_i32, %c0_i32_0 : i32, i32
  }
  func.func @transform_3(%arg0: i32) -> (i32, i32) {
    %c0_i32 = arith.constant 0 : i32
    %c0_i32_0 = arith.constant 0 : i32
    %c0_i32_1 = arith.constant 0 : i32
    return %c0_i32, %c0_i32_0 : i32, i32
  }
  func.func @transform_4(%arg0: i32) -> (i32, i32) {
    %c0_i32 = arith.constant 0 : i32
    %c0_i32_0 = arith.constant 0 : i32
    %c0_i32_1 = arith.constant 0 : i32
    return %c0_i32, %c0_i32_0 : i32, i32
  }
  func.func @transform_5(%arg0: i32) -> (i32, i32) {
    %c0_i32 = arith.constant 0 : i32
    %c0_i32_0 = arith.constant 0 : i32
    return %arg0, %c0_i32 : i32, i32
  }
}

</mosaic_0001>

<llo_original>
// kernel: tpu_custom_call.1
$region0: #{tpu_custom_call.1}
  #allocation0 [shape = 'u32[]', space=smem, size = 0x4, offset = 0x4, fixed_abs, tag = 'smem constant byte address 0x4 - core index']
  #allocation1 [shape = 'u32[72,128]{1,0:T(1,128)}', space=vmem, size = 0x9000, scoped, tag = 'internal scratch']
  %s0 = inlined_call_operand.vmem [shape: f32[8,10], index: 0, kind: input, shape index: {}]
  %s1 = inlined_call_operand.vmem [shape: f32[10,20], index: 1, kind: input, shape index: {}]
  %s2 = inlined_call_operand.vmem [shape: f32[1,20], index: 2, kind: input, shape index: {}]
  %s3 = inlined_call_operand.vmem [shape: f32[20,2], index: 3, kind: input, shape index: {}]
  %s4 = inlined_call_operand.vmem [shape: f32[1,2], index: 4, kind: input, shape index: {}]
  %s5 = inlined_call_operand.vmem [shape: f32[8,2], index: 5, kind: output, shape index: {}]
  %s6 = sld [smem:[#allocation0]]
  $region30: #{tpu_custom_call.1} parent=0
    _
  %s8 = ssub.s32 1, %s6
  %s9 = scalar_select 0, %s8, %s6
  // Predicated region
  $region2: #{tpu_custom_call.1} parent=0 // pred_check
    _
  $region3: #{tpu_custom_call.1} parent=0 // pred_check_branch
    %11 = sbr.rel (0) target = $region5
  $region4: #{tpu_custom_call.1} parent=0 // pred_region
    _
  $region5: #{tpu_custom_call.1} parent=0 // pred_fallthru
    _
  // Predicated region
  $region6: #{tpu_custom_call.1} parent=0 // pred_check
    _
  $region7: #{tpu_custom_call.1} parent=0 // pred_check_branch
    %13 = sbr.rel (0) target = $region9
  $region8: #{tpu_custom_call.1} parent=0 // pred_region
    _
  $region9: #{tpu_custom_call.1} parent=0 // pred_fallthru
    _
  // Predicated region
  $region10: #{tpu_custom_call.1} parent=0 // pred_check
    _
  $region11: #{tpu_custom_call.1} parent=0 // pred_check_branch
    %15 = sbr.rel (0) target = $region13
  $region12: #{tpu_custom_call.1} parent=0 // pred_region
    _
  $region13: #{tpu_custom_call.1} parent=0 // pred_fallthru
    _
  // Predicated region
  $region14: #{tpu_custom_call.1} parent=0 // pred_check
    _
  $region15: #{tpu_custom_call.1} parent=0 // pred_check_branch
    %17 = sbr.rel (0) target = $region17
  $region16: #{tpu_custom_call.1} parent=0 // pred_region
    _
  $region17: #{tpu_custom_call.1} parent=0 // pred_fallthru
    _
  // Predicated region
  $region18: #{tpu_custom_call.1} parent=0 // pred_check
    _
  $region19: #{tpu_custom_call.1} parent=0 // pred_check_branch
    %19 = sbr.rel (0) target = $region21
  $region20: #{tpu_custom_call.1} parent=0 // pred_region
    _
  $region21: #{tpu_custom_call.1} parent=0 // pred_fallthru
    _
  %v20 = vld [vmem:[%s0] sm:$0xff]
  %v21 = vld [vmem:[%s1] sm:$0xff]
  %v22 = vld [vmem:[%s1 + $0x8] sm:$0x3]
  %v23 = vld [vmem:[%s2] sm:$0x1]
  %v25 = vperm.slane %v23, 0
  %vm27 = vcmask 80896
  %v29 = vsel %vm27, %v20, 0
  %vm31 = vcmask 1041408
  %v33 = vsel %vm31, %v22, 0
  %35 = vmatpush.msra.mxu0 0.0
  %36 = vmatpush.msra.mxu0 0.0
  %37 = vmatpush.msra.mxu0 0.0
  %38 = vmatpush.msra.mxu0 0.0
  %39 = vmatpush.msra.mxu0 0.0
  %40 = vmatpush.msra.mxu0 0.0
  %41 = vmatpush.msra.mxu0 0.0
  %42 = vmatpush.msra.mxu0 0.0
  %43 = vmatpush.msra.mxu0 0.0
  %44 = vmatpush.msra.mxu0 0.0
  %45 = vmatpush.msra.mxu0 0.0
  %46 = vmatpush.msra.mxu0 0.0
  %47 = vmatpush.msra.mxu0 0.0
  %48 = vmatpush.msra.mxu0 0.0
  %49 = vmatpush.msra.mxu0 %v33
  %50 = vmatpush.msra.mxu0 %v21
  %51 = vmatmul.f32.gmra.mxu0 %v29
  %v52 = vpop.f32.mrf.mxu0
  %v53 = vadd.f32 %v25, %v52
  %54 = vdwg.mxu0
  %v55 = vmax.f32 %v53, 0.0
  %v56 = vld [vmem:[%s3] sm:$0xff]
  %v57 = vld [vmem:[%s3 + $0x8] sm:$0xff]
  %v58 = vld [vmem:[%s3 + $0x10] sm:$0xf]
  %v59 = vld [vmem:[%s4] sm:$0x1]
  %v61 = vperm.slane %v59, 0
  %vm63 = vcmask 162816
  %v65 = vsel %vm63, %v55, 0
  %vm67 = vcmask 1043456
  %v69 = vsel %vm67, %v58, 0
  %71 = vmatpush.msra.mxu0 0.0
  %72 = vmatpush.msra.mxu0 0.0
  %73 = vmatpush.msra.mxu0 0.0
  %74 = vmatpush.msra.mxu0 0.0
  %75 = vmatpush.msra.mxu0 0.0
  %76 = vmatpush.msra.mxu0 0.0
  %77 = vmatpush.msra.mxu0 0.0
  %78 = vmatpush.msra.mxu0 0.0
  %79 = vmatpush.msra.mxu0 0.0
  %80 = vmatpush.msra.mxu0 0.0
  %81 = vmatpush.msra.mxu0 0.0
  %82 = vmatpush.msra.mxu0 0.0
  %83 = vmatpush.msra.mxu0 0.0
  %84 = vmatpush.msra.mxu0 %v69
  %85 = vmatpush.msra.mxu0 %v57
  %86 = vmatpush.msra.mxu0 %v56
  %87 = vmatmul.f32.gmra.mxu0 %v65
  %v88 = vpop.f32.mrf.mxu0
  %v89 = vadd.f32 %v61, %v88
  %90 = vdwg.mxu0
  %vm91 = vcmask 15360
  %92 = vst.msk [vmem:[%s5] sm:$0xff] %vm91, %v89
  // Predicated region
  $region22: #{tpu_custom_call.1} parent=0 // pred_check
    _
  $region23: #{tpu_custom_call.1} parent=0 // pred_check_branch
    %94 = sbr.rel (0) target = $region25
  $region24: #{tpu_custom_call.1} parent=0 // pred_region
    _
  $region25: #{tpu_custom_call.1} parent=0 // pred_fallthru
    _
  // Predicated region
  $region26: #{tpu_custom_call.1} parent=0 // pred_check
    _
  $region27: #{tpu_custom_call.1} parent=0 // pred_check_branch
    %96 = sbr.rel (0) target = $region29
  $region28: #{tpu_custom_call.1} parent=0 // pred_region
    _
  $region29: #{tpu_custom_call.1} parent=0 // pred_fallthru
    _

</llo_original>
